<compile_context>
chip_gen: v5e
topology: v5e:2x2
jax: 0.10.0
libtpu: 0.0.40
codegen_flags: <defaults>
</compile_context>

<pallas_src>
import functools

import jax
import jax.numpy as jnp
from jax.experimental import pallas as pl
from jax.experimental.pallas import tpu as pltpu


def _round_up(x, m):
    return ((x + m - 1) // m) * m


# --------------------------- Resident-A kernel ------------------------------ #
def _gcn_resident_kernel(x_hbm, a_hbm, w_ref, b_ref, o_ref,
                         a_vmem, hw_buf, sems, *, n_layers, row_tile):
    l = pl.program_id(0)          # layer index (outermost, sequential)
    i = pl.program_id(1)          # node row-tile index

    # One-time prologue: DMA the input features straight into the resident
    # output buffer (it doubles as the running H) and A_hat into its
    # single-buffered bf16 scratch.  Both DMAs issued, then both awaited,
    # so they overlap each other.
    @pl.when((l == 0) & (i == 0))
    def _():
        cp_x = pltpu.make_async_copy(x_hbm, o_ref, sems.at[0])
        cp_a = pltpu.make_async_copy(a_hbm, a_vmem, sems.at[1])
        cp_x.start()
        cp_a.start()
        cp_x.wait()
        cp_a.wait()

    # Per-layer: HW = H_l @ W_l on the MXU (bf16 x bf16 -> f32 acc), stored
    # once per layer as bf16.
    @pl.when(i == 0)
    def _():
        hw_buf[...] = jnp.dot(
            o_ref[...].astype(jnp.bfloat16), w_ref[...],
            preferred_element_type=jnp.float32).astype(jnp.bfloat16)

    # Per-tile aggregation: A_hat[rows_i, :] @ HW (bf16 x bf16 -> f32).
    row0 = pl.multiple_of(i * row_tile, row_tile)
    a_tile = a_vmem[pl.ds(row0, row_tile), :]                 # (row_tile, NP) bf16
    agg = jnp.dot(a_tile, hw_buf[...],
                  preferred_element_type=jnp.float32)         # (row_tile, FP) f32

    # Epilogue: bias add (+ ReLU on all but the last layer).
    # NOTE: padded rows (>= n) receive 0 + b every layer -> garbage values in
    # padded rows of H.  This is safe ONLY because A_hat's padded *columns*
    # are zero, so padded rows of HW never reach valid outputs; the wrapper
    # slices them off.  Keep A's padded columns zero if the padding changes.
    agg = agg + b_ref[...]                                    # (1, FP) broadcast

    @pl.when(l < n_layers - 1)
    def _():
        o_ref[pl.ds(row0, row_tile), :] = jnp.maximum(agg, 0.0)

    @pl.when(l == n_layers - 1)
    def _():
        o_ref[pl.ds(row0, row_tile), :] = agg


# --------------------------- Streamed-A kernel ------------------------------ #
def _gcn_streamed_kernel(x_hbm, a_ref, w_ref, b_ref, o_ref,
                         hw_buf, acc_buf, sem, *, n_layers, row_tile, k_tile):
    l = pl.program_id(0)          # layer
    i = pl.program_id(1)          # row tile
    k = pl.program_id(2)          # contraction (column) tile of A_hat
    nk = pl.num_programs(2)

    # One-time: seed the resident output / running-H buffer with the features.
    @pl.when((l == 0) & (i == 0) & (k == 0))
    def _():
        cp = pltpu.make_async_copy(x_hbm, o_ref, sem.at[0])
        cp.start()
        cp.wait()

    # Per-layer: HW = H_l @ W_l (computed once, before any write of layer l).
    @pl.when((i == 0) & (k == 0))
    def _():
        hw_buf[...] = jnp.dot(
            o_ref[...].astype(jnp.bfloat16), w_ref[...],
            preferred_element_type=jnp.float32).astype(jnp.bfloat16)

    @pl.when(k == 0)
    def _():
        acc_buf[...] = jnp.zeros_like(acc_buf)

    # Partial aggregation: A_hat[rows_i, cols_k] @ HW[cols_k, :].
    col0 = pl.multiple_of(k * k_tile, k_tile)
    acc_buf[...] += jnp.dot(a_ref[...], hw_buf[pl.ds(col0, k_tile), :],
                            preferred_element_type=jnp.float32)

    row0 = pl.multiple_of(i * row_tile, row_tile)

    # Epilogue at the last k tile.  Same padded-row note as the resident
    # kernel: padded rows pick up the bias but never propagate (A padded
    # columns are zero) and are sliced off by the wrapper.
    @pl.when((k == nk - 1) & (l < n_layers - 1))
    def _():
        o_ref[pl.ds(row0, row_tile), :] = jnp.maximum(
            acc_buf[...] + b_ref[...], 0.0)

    @pl.when((k == nk - 1) & (l == n_layers - 1))
    def _():
        o_ref[pl.ds(row0, row_tile), :] = acc_buf[...] + b_ref[...]


# --------------------------------- Wrapper ----------------------------------- #
def gcn_forward(a_hat, feat, weights, biases, *,
                row_tile=256, k_tile=512, lane_pad=128, force_streamed=False):
    n = a_hat.shape[0]
    n_layers = len(weights)
    f_in = feat.shape[1]
    f_out_last = weights[-1].shape[1]
    assert k_tile % row_tile == 0 and k_tile % 128 == 0 and row_tile % 8 == 0

    # Lane-dense padded feature width shared by every layer.
    max_f = max([f_in] + [d for w in weights for d in w.shape])
    fp = _round_up(max(max_f, lane_pad), lane_pad)

    f32, bf16 = jnp.float32, jnp.bfloat16

    # ---- generation-aware VMEM budget (v5e/v6e 128 MiB, v7x 64 MiB) ---------
    try:
        vmem_cap = int(pltpu.get_tpu_info().vmem_capacity_bytes)
    except Exception:
        vmem_cap = 64 * 1024 * 1024          # conservative fallback (v7x-sized)
    vmem_limit = int(0.85 * vmem_cap)
    budget = int(0.90 * vmem_limit)          # headroom for compiler scratch

    wb_bytes = 2 * (fp * fp * 2 + fp * 4)    # double-buffered W_l (bf16) + b_l (f32)

    def _resident_bytes(np_):
        return (np_ * np_ * 2                # resident A_hat, bf16, single buffer
                + 2 * np_ * fp * 4           # resident output / running H (f32)
                + np_ * fp * 2               # hw_buf (bf16)
                + np_ * fp * 6               # H@W temporaries (bf16 lhs + f32 result)
                + wb_bytes)

    def _streamed_bytes(np_):
        return (2 * row_tile * k_tile * 2    # A blocks, bf16, double-buffered
                + 2 * np_ * fp * 4
                + np_ * fp * 2
                + np_ * fp * 6
                + row_tile * fp * 4          # f32 aggregation accumulator
                + wb_bytes)

    np_res = _round_up(max(n, row_tile), row_tile)
    np_str = _round_up(max(n, k_tile), k_tile)

    use_streamed = force_streamed or _resident_bytes(np_res) > budget
    if use_streamed and _streamed_bytes(np_str) > budget:
        raise ValueError(
            "GCN Pallas kernel: streamed-mode VMEM footprint "
            f"{_streamed_bytes(np_str)} B exceeds budget {budget} B "
            f"(n={n}, padded={np_str}, fp={fp}); H/HW row-tiling not implemented.")

    np_ = np_str if use_streamed else np_res
    n_row_tiles = np_ // row_tile

    # ---- padded operands (A/W in bf16 for the MXU; H/X/bias stay f32) -------
    a_pad = jnp.zeros((np_, np_), bf16).at[:n, :n].set(a_hat.astype(bf16))
    x_pad = jnp.zeros((np_, fp), f32).at[:n, :f_in].set(feat.astype(f32))

    w_stack = jnp.zeros((n_layers, fp, fp), bf16)
    b_stack = jnp.zeros((n_layers, 1, fp), f32)
    for li, (w, b) in enumerate(zip(weights, biases)):
        w_stack = w_stack.at[li, :w.shape[0], :w.shape[1]].set(w.astype(bf16))
        b_stack = b_stack.at[li, 0, :b.shape[-1]].set(b.reshape(-1).astype(f32))

    if not use_streamed:
        kernel = functools.partial(_gcn_resident_kernel,
                                   n_layers=n_layers, row_tile=row_tile)
        out = pl.pallas_call(
            kernel,
            out_shape=jax.ShapeDtypeStruct((np_, fp), f32),
            grid=(n_layers, n_row_tiles),
            in_specs=[
                pl.BlockSpec(memory_space=pl.ANY),        # X: HBM, copied once
                pl.BlockSpec(memory_space=pl.ANY),        # A_hat: HBM, copied once
                pl.BlockSpec((pl.Squeezed(), fp, fp), lambda l, i: (l, 0, 0)),  # W_l
                pl.BlockSpec((pl.Squeezed(), 1, fp), lambda l, i: (l, 0, 0)),   # b_l
            ],
            # Constant out block index: the running H / final output stays
            # VMEM-resident across all layers, single HBM writeback at the end.
            out_specs=pl.BlockSpec((np_, fp), lambda l, i: (0, 0)),
            scratch_shapes=[
                pltpu.VMEM((np_, np_), bf16),   # resident A_hat (single buffer)
                pltpu.VMEM((np_, fp), bf16),    # hw_buf = H_l @ W_l
                pltpu.SemaphoreType.DMA((2,)),
            ],
            # Both axes sequential: layer axis carries H, row tiles share
            # hw_buf computed at i == 0.
            compiler_params=pltpu.CompilerParams(
                dimension_semantics=("arbitrary", "arbitrary"),
                vmem_limit_bytes=vmem_limit,
            ),
        )(x_pad, a_pad, w_stack, b_stack)
    else:
        n_k_tiles = np_ // k_tile
        kernel = functools.partial(_gcn_streamed_kernel, n_layers=n_layers,
                                   row_tile=row_tile, k_tile=k_tile)
        out = pl.pallas_call(
            kernel,
            out_shape=jax.ShapeDtypeStruct((np_, fp), f32),
            grid=(n_layers, n_row_tiles, n_k_tiles),
            in_specs=[
                pl.BlockSpec(memory_space=pl.ANY),                          # X
                pl.BlockSpec((row_tile, k_tile), lambda l, i, k: (i, k)),   # A blocks
                pl.BlockSpec((pl.Squeezed(), fp, fp), lambda l, i, k: (l, 0, 0)),
                pl.BlockSpec((pl.Squeezed(), 1, fp), lambda l, i, k: (l, 0, 0)),
            ],
            out_specs=pl.BlockSpec((np_, fp), lambda l, i, k: (0, 0)),
            scratch_shapes=[
                pltpu.VMEM((np_, fp), bf16),        # hw_buf = H_l @ W_l
                pltpu.VMEM((row_tile, fp), f32),    # aggregation accumulator
                pltpu.SemaphoreType.DMA((1,)),
            ],
            compiler_params=pltpu.CompilerParams(
                dimension_semantics=("arbitrary", "arbitrary", "arbitrary"),
                vmem_limit_bytes=vmem_limit,
            ),
        )(x_pad, a_pad, w_stack, b_stack)

    return out[:n, :f_out_last]


# ------------------------------- Plain-JAX ref ------------------------------- #
def gcn_reference(a_hat, feat, weights, biases):
    h = feat
    n_layers = len(weights)
    for i in range(n_layers):
        h = a_hat @ (h @ weights[i]) + biases[i].reshape(1, -1)
        if i < n_layers - 1:
            h = jnp.maximum(h, 0.0)
    return h


# ----------------------------------- Main ------------------------------------ #
if __name__ == "__main__":
    def build_case(key, N, in_feats, n_hidden, n_classes, n_layers):
        k_adj, k_feat, k_bias, *k_ws = jax.random.split(key, 3 + n_layers)
        # Random symmetric graph (undirected) with self loops.
        adj_rand = jax.random.uniform(k_adj, (N, N))
        adj_sym = (adj_rand + adj_rand.T) * 0.5
        A = (adj_sym < 0.15).astype(jnp.float32)
        A = jnp.maximum(A, jnp.eye(N, dtype=jnp.float32))
        # DGL norm='both': src uses out-degree, dst uses in-degree (>= 1).
        out_deg = jnp.clip(A.sum(axis=0), 1.0)
        in_deg = jnp.clip(A.sum(axis=1), 1.0)
        a_hat = (in_deg[:, None] ** -0.5) * A * (out_deg[None, :] ** -0.5)
        feat = jax.random.normal(k_feat, (N, in_feats), dtype=jnp.float32)
        weights, biases = [], []
        for i in range(n_layers):
            f_in = in_feats if i == 0 else n_hidden
            f_out = n_classes if i == n_layers - 1 else n_hidden
            scale = (2.0 / (f_in + f_out)) ** 0.5
            w = scale * jax.random.normal(k_ws[i], (f_in, f_out), dtype=jnp.float32)
            weights.append(w)
            if i == n_layers - 1:
                b = 0.1 * jax.random.normal(k_bias, (1, f_out), dtype=jnp.float32)
            else:
                b = jnp.zeros((1, f_out), dtype=jnp.float32)  # GraphConv(bias=False)
            biases.append(b)
        return a_hat, feat, weights, biases

    key = jax.random.PRNGKey(0)
    k1, k2 = jax.random.split(key)

    # Case 1: small graph -> resident-A mode (A DMA'd once, kept in VMEM).
    a_hat, feat, weights, biases = build_case(k1, 32, 8, 16, 4, 3)
    out = jax.block_until_ready(gcn_forward(a_hat, feat, weights, biases))
    ref = gcn_reference(a_hat, feat, weights, biases)
    assert out.shape == ref.shape
    # bf16 matmuls (f32 accumulation) -> looser tolerance than pure f32.
    assert jnp.allclose(out, ref, atol=5e-2, rtol=5e-2), "resident mode mismatch"

    # Case 2: force the streamed-A mode (multiple row tiles and k tiles) to
    # validate the large-graph path at small shapes.
    a_hat, feat, weights, biases = build_case(k2, 300, 8, 16, 4, 3)
    out = jax.block_until_ready(
        gcn_forward(a_hat, feat, weights, biases,
                    row_tile=128, k_tile=256, force_streamed=True))
    ref = gcn_reference(a_hat, feat, weights, biases)
    assert out.shape == ref.shape
    assert jnp.allclose(out, ref, atol=5e-2, rtol=5e-2), "streamed mode mismatch"

    print("KERNEL_OK")
</pallas_src>

<mosaic_0001>
module attributes {stable_mosaic.version = 11 : i64} {
  func.func @_gcn_resident_kernel(%arg0: i32, %arg1: i32, %arg2: memref<256x128xf32, #tpu.memory_space<any>>, %arg3: memref<256x256xbf16, #tpu.memory_space<any>>, %arg4: memref<1x128x128xbf16, #tpu.memory_space<vmem>>, %arg5: memref<1x1x128xf32, #tpu.memory_space<vmem>>, %arg6: memref<256x128xf32, #tpu.memory_space<vmem>>, %arg7: memref<256x256xbf16, #tpu.memory_space<vmem>>, %arg8: memref<256x128xbf16, #tpu.memory_space<vmem>>, %arg9: memref<2x!tpu.dma_semaphore, #tpu.memory_space<semaphore_mem>>) attributes {dimension_semantics = [#tpu.dimension_semantics<arbitrary>, #tpu.dimension_semantics<arbitrary>], iteration_bounds = array<i64: 3, 1>, scalar_prefetch = 0 : i64, scratch_operands = 3 : i64, tpu.core_type = #tpu.core_type<tc>, window_params = [{}, {}, {transform_indices = @transform_2, window_bounds = array<i64: 1, 128, 128>}, {transform_indices = @transform_3, window_bounds = array<i64: 1, 1, 128>}, {pipeline_mode = #tpu.pipeline_mode<synchronous>, transform_indices = @transform_4, window_bounds = array<i64: 256, 128>}]} {
    %c0_i32 = arith.constant 0 : i32
    %0 = arith.cmpi eq, %arg0, %c0_i32 : i32
    %c0_i32_0 = arith.constant 0 : i32
    %1 = arith.cmpi eq, %arg1, %c0_i32_0 : i32
    %2 = arith.andi %0, %1 : i1
    %3 = arith.extui %2 : i1 to i32
    %c0_i32_1 = arith.constant 0 : i32
    %4 = arith.cmpi ne, %3, %c0_i32_1 : i32
    scf.if %4 {
      %c0_i32_12 = arith.constant 0 : i32
      %24 = tpu.memref_slice %arg9[%c0_i32_12] : memref<2x!tpu.dma_semaphore, #tpu.memory_space<semaphore_mem>> -> memref<1x!tpu.dma_semaphore, #tpu.memory_space<semaphore_mem>>
      %25 = tpu.memref_squeeze %24 : memref<1x!tpu.dma_semaphore, #tpu.memory_space<semaphore_mem>> -> memref<!tpu.dma_semaphore, #tpu.memory_space<semaphore_mem>>
      tpu.enqueue_dma source(%arg2 : memref<256x128xf32, #tpu.memory_space<any>>) target(%arg6 : memref<256x128xf32, #tpu.memory_space<vmem>>) target_semaphore(%25 : memref<!tpu.dma_semaphore, #tpu.memory_space<semaphore_mem>>)
      %c1_i32 = arith.constant 1 : i32
      %26 = tpu.memref_slice %arg9[%c1_i32] : memref<2x!tpu.dma_semaphore, #tpu.memory_space<semaphore_mem>> -> memref<1x!tpu.dma_semaphore, #tpu.memory_space<semaphore_mem>>
      %27 = tpu.memref_squeeze %26 : memref<1x!tpu.dma_semaphore, #tpu.memory_space<semaphore_mem>> -> memref<!tpu.dma_semaphore, #tpu.memory_space<semaphore_mem>>
      tpu.enqueue_dma source(%arg3 : memref<256x256xbf16, #tpu.memory_space<any>>) target(%arg7 : memref<256x256xbf16, #tpu.memory_space<vmem>>) target_semaphore(%27 : memref<!tpu.dma_semaphore, #tpu.memory_space<semaphore_mem>>)
      %c0_i32_13 = arith.constant 0 : i32
      %28 = tpu.memref_slice %arg9[%c0_i32_13] : memref<2x!tpu.dma_semaphore, #tpu.memory_space<semaphore_mem>> -> memref<1x!tpu.dma_semaphore, #tpu.memory_space<semaphore_mem>>
      %29 = tpu.memref_squeeze %28 : memref<1x!tpu.dma_semaphore, #tpu.memory_space<semaphore_mem>> -> memref<!tpu.dma_semaphore, #tpu.memory_space<semaphore_mem>>
      tpu.wait_dma2 semaphore(%29 : memref<!tpu.dma_semaphore, #tpu.memory_space<semaphore_mem>>) src(%arg2 : memref<256x128xf32, #tpu.memory_space<any>>) dst(%arg6 : memref<256x128xf32, #tpu.memory_space<vmem>>)
      %c1_i32_14 = arith.constant 1 : i32
      %30 = tpu.memref_slice %arg9[%c1_i32_14] : memref<2x!tpu.dma_semaphore, #tpu.memory_space<semaphore_mem>> -> memref<1x!tpu.dma_semaphore, #tpu.memory_space<semaphore_mem>>
      %31 = tpu.memref_squeeze %30 : memref<1x!tpu.dma_semaphore, #tpu.memory_space<semaphore_mem>> -> memref<!tpu.dma_semaphore, #tpu.memory_space<semaphore_mem>>
      tpu.wait_dma2 semaphore(%31 : memref<!tpu.dma_semaphore, #tpu.memory_space<semaphore_mem>>) src(%arg3 : memref<256x256xbf16, #tpu.memory_space<any>>) dst(%arg7 : memref<256x256xbf16, #tpu.memory_space<vmem>>)
    } else {
    }
    %c0_i32_2 = arith.constant 0 : i32
    %5 = arith.cmpi eq, %arg1, %c0_i32_2 : i32
    %6 = arith.extui %5 : i1 to i32
    %c0_i32_3 = arith.constant 0 : i32
    %7 = arith.cmpi ne, %6, %c0_i32_3 : i32
    scf.if %7 {
      %c0_12 = arith.constant 0 : index
      %c0_13 = arith.constant 0 : index
      %24 = vector.load %arg6[%c0_12, %c0_13] : memref<256x128xf32, #tpu.memory_space<vmem>>, vector<256x128xf32>
      %25 = arith.truncf %24 : vector<256x128xf32> to vector<256x128xbf16>
      %c0_14 = arith.constant 0 : index
      %c0_15 = arith.constant 0 : index
      %c0_16 = arith.constant 0 : index
      %26 = vector.load %arg4[%c0_14, %c0_15, %c0_16] : memref<1x128x128xbf16, #tpu.memory_space<vmem>>, vector<1x128x128xbf16>
      %27 = vector.shape_cast %26 : vector<1x128x128xbf16> to vector<128x128xbf16>
      %cst_17 = arith.constant dense<0.000000e+00> : vector<256x128xf32>
      %28 = tpu.matmul %25, %27, %cst_17 {dimension_numbers = #tpu.dot_dimension_numbers<[1], [0], [0], [1], [0, 0, 1, 1], [], []>} : vector<256x128xbf16>, vector<128x128xbf16>, vector<256x128xf32> -> vector<256x128xf32>
      %29 = arith.truncf %28 : vector<256x128xf32> to vector<256x128xbf16>
      %c0_18 = arith.constant 0 : index
      %c0_19 = arith.constant 0 : index
      %30 = vector.load %arg8[%c0_18, %c0_19] : memref<256x128xbf16, #tpu.memory_space<vmem>>, vector<256x128xbf16>
      tpu.vector_store %arg8[%c0_18, %c0_19], %29 {strides = array<i32>} : memref<256x128xbf16, #tpu.memory_space<vmem>>, vector<256x128xbf16>,
    } else {
    }
    %c256_i32 = arith.constant 256 : i32
    %8 = arith.muli %arg1, %c256_i32 : i32
    %9 = tpu.assume_multiple %8, 256 : i32
    %10 = arith.index_cast %9 : i32 to index
    %c0 = arith.constant 0 : index
    %11 = vector.load %arg7[%10, %c0] : memref<256x256xbf16, #tpu.memory_space<vmem>>, vector<256x256xbf16>
    %c0_4 = arith.constant 0 : index
    %c0_5 = arith.constant 0 : index
    %12 = vector.load %arg8[%c0_4, %c0_5] : memref<256x128xbf16, #tpu.memory_space<vmem>>, vector<256x128xbf16>
    %cst = arith.constant dense<0.000000e+00> : vector<256x128xf32>
    %13 = tpu.matmul %11, %12, %cst {dimension_numbers = #tpu.dot_dimension_numbers<[1], [0], [0], [1], [0, 0, 1, 1], [], []>} : vector<256x256xbf16>, vector<256x128xbf16>, vector<256x128xf32> -> vector<256x128xf32>
    %c0_6 = arith.constant 0 : index
    %c0_7 = arith.constant 0 : index
    %c0_8 = arith.constant 0 : index
    %14 = vector.load %arg5[%c0_6, %c0_7, %c0_8] : memref<1x1x128xf32, #tpu.memory_space<vmem>>, vector<1x1x128xf32>
    %15 = vector.shape_cast %14 : vector<1x1x128xf32> to vector<1x128xf32>
    %16 = vector.broadcast %15 : vector<1x128xf32> to vector<256x128xf32>
    %17 = arith.addf %13, %16 : vector<256x128xf32>
    %c2_i32 = arith.constant 2 : i32
    %18 = arith.cmpi slt, %arg0, %c2_i32 : i32
    %19 = arith.extui %18 : i1 to i32
    %c0_i32_9 = arith.constant 0 : i32
    %20 = arith.cmpi ne, %19, %c0_i32_9 : i32
    scf.if %20 {
      %cst_12 = arith.constant 0.000000e+00 : f32
      %24 = vector.broadcast %cst_12 : f32 to vector<256x128xf32>
      %25 = arith.maximumf %17, %24 : vector<256x128xf32>
      %26 = arith.index_cast %9 : i32 to index
      %c0_13 = arith.constant 0 : index
      %27 = vector.load %arg6[%26, %c0_13] : memref<256x128xf32, #tpu.memory_space<vmem>>, vector<256x128xf32>
      tpu.vector_store %arg6[%26, %c0_13], %25 {strides = array<i32>} : memref<256x128xf32, #tpu.memory_space<vmem>>, vector<256x128xf32>,
    } else {
    }
    %c2_i32_10 = arith.constant 2 : i32
    %21 = arith.cmpi eq, %arg0, %c2_i32_10 : i32
    %22 = arith.extui %21 : i1 to i32
    %c0_i32_11 = arith.constant 0 : i32
    %23 = arith.cmpi ne, %22, %c0_i32_11 : i32
    scf.if %23 {
      %24 = arith.index_cast %9 : i32 to index
      %c0_12 = arith.constant 0 : index
      %25 = vector.load %arg6[%24, %c0_12] : memref<256x128xf32, #tpu.memory_space<vmem>>, vector<256x128xf32>
      tpu.vector_store %arg6[%24, %c0_12], %17 {strides = array<i32>} : memref<256x128xf32, #tpu.memory_space<vmem>>, vector<256x128xf32>,
    } else {
    }
    return
  }
  func.func @transform_2(%arg0: i32, %arg1: i32) -> (i32, i32, i32) {
    %c0_i32 = arith.constant 0 : i32
    %c0_i32_0 = arith.constant 0 : i32
    %c0_i32_1 = arith.constant 0 : i32
    return %arg0, %c0_i32, %c0_i32_0 : i32, i32, i32
  }
  func.func @transform_3(%arg0: i32, %arg1: i32) -> (i32, i32, i32) {
    %c0_i32 = arith.constant 0 : i32
    %c0_i32_0 = arith.constant 0 : i32
    %c0_i32_1 = arith.constant 0 : i32
    return %arg0, %c0_i32, %c0_i32_0 : i32, i32, i32
  }
  func.func @transform_4(%arg0: i32, %arg1: i32) -> (i32, i32) {
    %c0_i32 = arith.constant 0 : i32
    %c0_i32_0 = arith.constant 0 : i32
    %c0_i32_1 = arith.constant 0 : i32
    return %c0_i32, %c0_i32_0 : i32, i32
  }
}

</mosaic_0001>

<llo_original>
// kernel: tpu_custom_call.1
$region0: #{tpu_custom_call.1}
  #allocation0 [shape = 'u32[]', space=smem, size = 0x4, offset = 0x4, fixed_abs, tag = 'smem constant byte address 0x4 - core index']
  #allocation1 [shape = 'u32[72,128]{1,0:T(1,128)}', space=vmem, size = 0x9000, scoped, tag = 'internal scratch']
  #allocation2 [shape = 'bf16[256,256]{1,0:T(8,128)(2,1)}', space=vmem, size = 0x20000, scoped, tag = 'scratch operand']
  #allocation3 [shape = 'bf16[256,128]{1,0:T(8,128)(2,1)}', space=vmem, size = 0x10000, scoped, tag = 'scratch operand']
  #allocation4 [shape = 's32[2]{0}', space=sflag, size = 0x8, scoped, tag = 'scratch operand']
  #allocation11 [shape = 's32[]', space=sflag, size = 0x4, offset = 0, fixed_abs, tag = 'sflag constant byte address 0x0 - dummy sync flag']
  #allocation12 [shape = 's32[]', space=sflag, size = 0x4, offset = 0, fixed_abs, tag = 'sflag constant byte address 0x0 - dummy sync flag']
  #allocation13 [shape = 'u32[]', space=smem, size = 0x4, offset = 0x44, fixed_abs, tag = 'smem constant byte address 0x44 - assertion arg 0']
  #allocation14 [shape = 'u32[]', space=smem, size = 0x4, offset = 0x48, fixed_abs, tag = 'smem constant byte address 0x48 - assertion arg 1']
  #allocation15 [shape = 's32[]', space=sflag, size = 0x4, offset = 0, fixed_abs, tag = 'sflag constant byte address 0x0 - dummy sync flag']
  #allocation16 [shape = 's32[]', space=sflag, size = 0x4, offset = 0, fixed_abs, tag = 'sflag constant byte address 0x0 - dummy sync flag']
  %s0 = inlined_call_operand.hbm [shape: f32[256,128], index: 0, kind: input, shape index: {}]
  %s1 = inlined_call_operand.hbm [shape: bf16[256,256], index: 1, kind: input, shape index: {}]
  %s2 = inlined_call_operand.hbm [shape: bf16[3,128,128], index: 2, kind: input, shape index: {}]
  %s3 = inlined_call_operand.hbm [shape: f32[3,1,128], index: 3, kind: input, shape index: {}]
  %s4 = inlined_call_operand.hbm [shape: f32[256,128], index: 4, kind: output, shape index: {}]
  %s5 = sld [smem:[#allocation0]]
  $region73: #{tpu_custom_call.1} parent=0
    _
  %s7 = ssub.s32 1, %s5
  %s8 = scalar_select 0, %s7, %s5
  $region1: #{tpu_custom_call.1} parent=0
    #allocation5 [shape = 'u8[65536]{0}', space=vmem, size = 0x10000, scoped, tag = 'input window, operand 2']
    #allocation6 [shape = 's32[2]{0}', space=sflag, size = 0x8, scoped, tag = 'scoped memory for tpu_custom_call.1']
    #allocation7 [shape = 's32[2]{0}', space=sflag, size = 0x8, scoped, tag = 'scoped memory for tpu_custom_call.1']
    #allocation8 [shape = 'u8[1024]{0}', space=vmem, size = 0x400, scoped, tag = 'input window, operand 3']
    #allocation9 [shape = 's32[2]{0}', space=sflag, size = 0x8, scoped, tag = 'scoped memory for tpu_custom_call.1']
    #allocation10 [shape = 'u8[131072]{0}', space=vmem, size = 0x20000, scoped, tag = 'output window, operand 0, single buffered']
    %9 = vsyncpa [#allocation6], 0
    %s10 = scalar_lea.sflag [#allocation6], 1
    %11 = vsyncpa %s10, 0
    %12 = vsyncpa [#allocation9], 0
    %s13 = scalar_lea.sflag [#allocation9], 1
    %14 = vsyncpa %s13, 0
    %15 = vsyncpa [#allocation7], 0
    loop: start=0, step=1, limit=5
    $region2: #{tpu_custom_call.1} parent=1 // loop_pre_header
      _
    $region3: #{tpu_custom_call.1} parent=1 // loop_header
      %s17 = sphi 0, %s21
      %p18 = scmp.ge.s32.totalorder %s17, 5
      %s24 = sphi 0, %s36
      %s25 = sphi 0, %s32
      %s26 = sphi 0, %s24
      %s27 = sphi 0, %s25
      %s28 = sphi 0, %s26
      %s29 = sphi 0, %s27
      %s39 = sphi 0, %s41
      %s42 = sphi 0, %s39
      %s43 = sphi 0, %s42
      %s59 = sphi 0, %s43
      %s65 = sphi 0, %s67
      %s68 = sphi 0, %s65
      %s69 = sphi 0, %s68
      %s85 = sphi 0, %s69
      %s89 = sphi 0, %s89
      %s91 = sphi 0, %s89
      %s92 = sphi 0, %s91
      %s106 = sphi 0, %s92
    $region4: #{tpu_custom_call.1} parent=1 // loop_header_branch
      %20 = sbr.rel (%p18) target = $region8
    $region5: #{tpu_custom_call.1} parent=1 // loop_body
      %s22 = ssub.s32 %s17, 1
      %s23 = ssub.s32 %s17, 2
      %s30 = sadd.s32 1, %s25
      %p31 = scmp.ge.s32.totalorder %s30, 1
      %s32 = scalar_select %p31, 0, %s30
      %s33 = sadd.s32 1, %s24
      %s34 = scalar_select %p31, %s33, %s24
      %p35 = scmp.ge.s32.totalorder %s34, 3
      %s36 = scalar_select %p35, 0, %s34
      %s37 = ssub.s32 %s24, %s36
      %p38 = scmp.eq.s32.totalorder %s37, 0
      %s40 = sadd.s32 %s39, 1
      %s41 = scalar_select %p38, %s39, %s40
      %p44 = pneg %p38
      %p45 = scmp.eq.s32.totalorder %s17, 2
      %p46 = por %p44, %p45
      %p47 = scmp.ne.s32.totalorder %s39, %s42
      %p48 = scmp.eq.s32.totalorder %s17, 0
      %p49 = por %p47, %p48
      %p50 = scmp.ne.s32.totalorder %s39, %s42
      %p51 = scmp.eq.s32.totalorder %s22, 2
      %p52 = por %p50, %p51
      %p53 = scmp.ne.s32.totalorder %s42, %s43
      %p54 = scmp.eq.s32.totalorder %s22, 0
      %p55 = por %p53, %p54
      %p56 = scmp.ne.s32.totalorder %s42, %s43
      %p57 = scmp.eq.s32.totalorder %s23, 2
      %p58 = por %p56, %p57
      %p60 = scmp.ne.s32.totalorder %s43, %s59
      %p61 = scmp.eq.s32.totalorder %s23, 0
      %p62 = por %p60, %p61
      %s63 = ssub.s32 %s24, %s36
      %p64 = scmp.eq.s32.totalorder %s63, 0
      %s66 = sadd.s32 %s65, 1
      %s67 = scalar_select %p64, %s65, %s66
      %p70 = pneg %p64
      %p71 = scmp.eq.s32.totalorder %s17, 2
      %p72 = por %p70, %p71
      %p73 = scmp.ne.s32.totalorder %s65, %s68
      %p74 = scmp.eq.s32.totalorder %s17, 0
      %p75 = por %p73, %p74
      %p76 = scmp.ne.s32.totalorder %s65, %s68
      %p77 = scmp.eq.s32.totalorder %s22, 2
      %p78 = por %p76, %p77
      %p79 = scmp.ne.s32.totalorder %s68, %s69
      %p80 = scmp.eq.s32.totalorder %s22, 0
      %p81 = por %p79, %p80
      %p82 = scmp.ne.s32.totalorder %s68, %s69
      %p83 = scmp.eq.s32.totalorder %s23, 2
      %p84 = por %p82, %p83
      %p86 = scmp.ne.s32.totalorder %s69, %s85
      %p87 = scmp.eq.s32.totalorder %s23, 0
      %p88 = por %p86, %p87
      %s90 = sadd.s32 %s89, 1
      %p93 = scmp.eq.s32.totalorder %s17, 2
      %p94 = scmp.ne.s32.totalorder %s89, %s91
      %p95 = scmp.eq.s32.totalorder %s17, 0
      %p96 = por %p94, %p95
      %p97 = scmp.ne.s32.totalorder %s89, %s91
      %p98 = scmp.eq.s32.totalorder %s22, 2
      %p99 = por %p97, %p98
      %p100 = scmp.ne.s32.totalorder %s91, %s92
      %p101 = scmp.eq.s32.totalorder %s22, 0
      %p102 = por %p100, %p101
      %p103 = scmp.ne.s32.totalorder %s91, %s92
      %p104 = scmp.eq.s32.totalorder %s23, 2
      %p105 = por %p103, %p104
      %p107 = scmp.ne.s32.totalorder %s92, %s106
      %p108 = scmp.eq.s32.totalorder %s23, 0
      %p109 = por %p107, %p108
      %p110 = scmp.le.s32.totalorder 1, %s17
      %p111 = scmp.lt.s32.totalorder %s17, 4
      %p112 = pnand %p110, %p111
      %p113 = pneg %p112
      // Predicated region
      $region9: #{tpu_custom_call.1} parent=5 // pred_check
        _
      $region10: #{tpu_custom_call.1} parent=5 // pred_check_branch
        %115 = sbr.rel (%p112) target = $region12
      $region11: #{tpu_custom_call.1} parent=5 // pred_region
        %s116 = ssub.s32 %s17, 1
      $region12: #{tpu_custom_call.1} parent=5 // pred_fallthru
        _
      %p117 = scmp.lt.s32.totalorder %s17, 3
      // Predicated region
      $region13: #{tpu_custom_call.1} parent=5 // pred_check
        %p118 = pneg %p117
      $region14: #{tpu_custom_call.1} parent=5 // pred_check_branch
        %120 = sbr.rel (%p118) target = $region16
      $region15: #{tpu_custom_call.1} parent=5 // pred_region
        // Predicated region
        $region17: #{tpu_custom_call.1} parent=15 // pred_check
          %p121 = pneg %p49
        $region18: #{tpu_custom_call.1} parent=15 // pred_check_branch
          %123 = sbr.rel (%p121) target = $region20
        $region19: #{tpu_custom_call.1} parent=15 // pred_region
          %s124 = sand.u32 %s39, 1
          %s125 = scalar_lea.sflag [#allocation6], %s124
          %s126 = sand.u32 %s39, 1
          %s127 = smul.addr %s126, 64
          %s128 = scalar_lea.vmem [#allocation5], %s127
          %130 = vsyncadd %s125, 0
          %s131 = smul.addr %s24, 16
          %s132 = smul.addr %s131, 4
          %s133 = scalar_lea.hbm %s2, %s132
          %s134 = sshll.u32 %s133, 4
          %s135 = int_to_ptr.hbm [resolvable:$true] %s134
          %s136 = sshll.u32 %s128, 4
          %s137 = int_to_ptr.vmem [resolvable:$true] %s136
          %142 = dma.hbm_to_vmem [thread:$0]  %s135, 1024, %s137, %s125, 64, 64, 4
        $region20: #{tpu_custom_call.1} parent=15 // pred_fallthru
          _
        // Predicated region
        $region21: #{tpu_custom_call.1} parent=15 // pred_check
          %p143 = pneg %p75
        $region22: #{tpu_custom_call.1} parent=15 // pred_check_branch
          %145 = sbr.rel (%p143) target = $region24
        $region23: #{tpu_custom_call.1} parent=15 // pred_region
          %s146 = sand.u32 %s65, 1
          %s147 = scalar_lea.sflag [#allocation9], %s146
          %s148 = sand.u32 %s65, 1
          %s149 = scalar_lea.vmem [#allocation8], %s148
          %151 = vsyncadd %s147, 0
          %s152 = scalar_lea.hbm %s3, %s24
          %s154 = sshll.u32 %s152, 4
          %s155 = int_to_ptr.hbm [resolvable:$true] %s154
          %s156 = sshll.u32 %s149, 4
          %s157 = int_to_ptr.vmem [resolvable:$true] %s156
          %159 = dma.hbm_to_vmem [thread:$0]  %s155, 16, %s157, %s147
        $region24: #{tpu_custom_call.1} parent=15 // pred_fallthru
          _
      $region16: #{tpu_custom_call.1} parent=5 // pred_fallthru
        _
      %p160 = scmp.le.s32.totalorder 1, %s17
      %p161 = scmp.lt.s32.totalorder %s17, 4
      %p162 = pnand %p160, %p161
      %p163 = pneg %p162
      // Predicated region
      $region25: #{tpu_custom_call.1} parent=5 // pred_check
        _
      $region26: #{tpu_custom_call.1} parent=5 // pred_check_branch
        %165 = sbr.rel (%p162) target = $region28
      $region27: #{tpu_custom_call.1} parent=5 // pred_region
        %s166 = ssub.s32 %s17, 1
        %s167 = sand.u32 %s42, 1
        %s168 = scalar_lea.sflag [#allocation6], %s167
        %s169 = sand.u32 %s42, 1
        %s170 = smul.addr %s169, 64
        %s171 = scalar_lea.vmem [#allocation5], %s170
        // Predicated region
        $region29: #{tpu_custom_call.1} parent=27 // pred_check
          %p172 = pneg %p55
        $region30: #{tpu_custom_call.1} parent=27 // pred_check_branch
          %174 = sbr.rel (%p172) target = $region32
        $region31: #{tpu_custom_call.1} parent=27 // pred_region
          %176 = dma.done %s168, 1024
        $region32: #{tpu_custom_call.1} parent=27 // pred_fallthru
          _
        %s177 = sand.u32 %s68, 1
        %s178 = scalar_lea.sflag [#allocation9], %s177
        %s179 = sand.u32 %s68, 1
        %s180 = scalar_lea.vmem [#allocation8], %s179
        // Predicated region
        $region33: #{tpu_custom_call.1} parent=27 // pred_check
          %p181 = pneg %p81
        $region34: #{tpu_custom_call.1} parent=27 // pred_check_branch
          %183 = sbr.rel (%p181) target = $region36
        $region35: #{tpu_custom_call.1} parent=27 // pred_region
          %185 = dma.done %s178, 16
        $region36: #{tpu_custom_call.1} parent=27 // pred_fallthru
          _
        %s186 = sand.u32 %s42, 1
        %s187 = scalar_lea.sflag [#allocation6], %s186
        %s188 = sand.u32 %s42, 1
        %s189 = smul.addr %s188, 64
        %s190 = scalar_lea.vmem [#allocation5], %s189
        %p191 = pneg %p55
        %p192 = pneg %p52
        %s193 = sand.u32 %s68, 1
        %s194 = scalar_lea.sflag [#allocation9], %s193
        %s195 = sand.u32 %s68, 1
        %s196 = scalar_lea.vmem [#allocation8], %s195
        %p197 = pneg %p81
        %p198 = pneg %p78
        %p199 = pneg %p102
        %p200 = pneg %p99
        %p201 = scmp.eq.s32.totalorder %s26, 0
        %p202 = scmp.eq.s32.totalorder %s27, 0
        %p203 = pnand %p201, %p202
        %p204 = pneg %p203
        // Predicated region
        $region37: #{tpu_custom_call.1} parent=27 // pred_check
          _
        $region38: #{tpu_custom_call.1} parent=27 // pred_check_branch
          %206 = sbr.rel (%p203) target = $region40
        $region39: #{tpu_custom_call.1} parent=27 // pred_region
          // Predicated region
          $region41: #{tpu_custom_call.1} parent=39 // pred_check
            _
          $region42: #{tpu_custom_call.1} parent=39 // pred_check_branch
            %208 = sbr.rel target = $region44
          $region43: #{tpu_custom_call.1} parent=39 // pred_region
            %209 = sst [smem:[#allocation13]] [#allocation12]
            %210 = sst [smem:[#allocation14]] [#allocation11]
          $region44: #{tpu_custom_call.1} parent=39 // pred_fallthru
            _
          %212 = shalt.err (0)
          %s214 = sshll.u32 %s0, 4
          %s215 = int_to_ptr.hbm [resolvable:$true] %s214
          %s216 = sshll.u32 [#allocation10], 4
          %s217 = int_to_ptr.vmem [resolvable:$true] %s216
          %219 = dma.hbm_to_vmem [thread:$0]  %s215, 4096, %s217, [#allocation4]
          %s220 = scalar_lea.sflag [#allocation4], 1
          // Predicated region
          $region45: #{tpu_custom_call.1} parent=39 // pred_check
            _
          $region46: #{tpu_custom_call.1} parent=39 // pred_check_branch
            %222 = sbr.rel target = $region48
          $region47: #{tpu_custom_call.1} parent=39 // pred_region
            %223 = sst [smem:[#allocation13]] [#allocation16]
            %224 = sst [smem:[#allocation14]] [#allocation15]
          $region48: #{tpu_custom_call.1} parent=39 // pred_fallthru
            _
          %226 = shalt.err (0)
          %s228 = sshll.u32 %s1, 4
          %s229 = int_to_ptr.hbm [resolvable:$true] %s228
          %s230 = sshll.u32 [#allocation2], 4
          %s231 = int_to_ptr.vmem [resolvable:$true] %s230
          %233 = dma.hbm_to_vmem [thread:$0]  %s229, 4096, %s231, %s220
          %s234 = smul.u32 256, 1
          %s235 = sshll.u32 %s234, 4
          %236 = dma.done [#allocation4], %s235
          %s237 = smul.u32 4, 32
          %s238 = smul.u32 %s237, 2
          %s239 = sshll.u32 %s238, 4
          %240 = dma.done %s220, %s239
        $region40: #{tpu_custom_call.1} parent=27 // pred_fallthru
          _
        // Predicated region
        $region49: #{tpu_custom_call.1} parent=27 // pred_check
          %p241 = pneg %p202
        $region50: #{tpu_custom_call.1} parent=27 // pred_check_branch
          %243 = sbr.rel (%p241) target = $region52
        $region51: #{tpu_custom_call.1} parent=27 // pred_region
          %v244 = vld [vmem:[#allocation10] sm:$0xff]
          %v245 = vld [vmem:[#allocation10 + $0x8] sm:$0xff]
          %v246 = vld [vmem:[#allocation10 + $0x10] sm:$0xff]
          %v247 = vld [vmem:[#allocation10 + $0x18] sm:$0xff]
          %v248 = vld [vmem:[#allocation10 + $0x20] sm:$0xff]
          %v249 = vld [vmem:[#allocation10 + $0x28] sm:$0xff]
          %v250 = vld [vmem:[#allocation10 + $0x30] sm:$0xff]
          %v251 = vld [vmem:[#allocation10 + $0x38] sm:$0xff]
          %v252 = vld [vmem:[#allocation10 + $0x40] sm:$0xff]
          %v253 = vld [vmem:[#allocation10 + $0x48] sm:$0xff]
          %v254 = vld [vmem:[#allocation10 + $0x50] sm:$0xff]
          %v255 = vld [vmem:[#allocation10 + $0x58] sm:$0xff]
          %v256 = vld [vmem:[#allocation10 + $0x60] sm:$0xff]
          %v257 = vld [vmem:[#allocation10 + $0x68] sm:$0xff]
          %v258 = vld [vmem:[#allocation10 + $0x70] sm:$0xff]
          %v259 = vld [vmem:[#allocation10 + $0x78] sm:$0xff]
          %v260 = vld [vmem:[#allocation10 + $0x80] sm:$0xff]
          %v261 = vld [vmem:[#allocation10 + $0x88] sm:$0xff]
          %v262 = vld [vmem:[#allocation10 + $0x90] sm:$0xff]
          %v263 = vld [vmem:[#allocation10 + $0x98] sm:$0xff]
          %v264 = vld [vmem:[#allocation10 + $0xa0] sm:$0xff]
          %v265 = vld [vmem:[#allocation10 + $0xa8] sm:$0xff]
          %v266 = vld [vmem:[#allocation10 + $0xb0] sm:$0xff]
          %v267 = vld [vmem:[#allocation10 + $0xb8] sm:$0xff]
          %v268 = vld [vmem:[#allocation10 + $0xc0] sm:$0xff]
          %v269 = vld [vmem:[#allocation10 + $0xc8] sm:$0xff]
          %v270 = vld [vmem:[#allocation10 + $0xd0] sm:$0xff]
          %v271 = vld [vmem:[#allocation10 + $0xd8] sm:$0xff]
          %v272 = vld [vmem:[#allocation10 + $0xe0] sm:$0xff]
          %v273 = vld [vmem:[#allocation10 + $0xe8] sm:$0xff]
          %v274 = vld [vmem:[#allocation10 + $0xf0] sm:$0xff]
          %v275 = vld [vmem:[#allocation10 + $0xf8] sm:$0xff]
          %v276 = vpack.c.bf16 %v245, %v244
          %v277 = vpack.c.bf16 %v247, %v246
          %v278 = vpack.c.bf16 %v249, %v248
          %v279 = vpack.c.bf16 %v251, %v250
          %v280 = vpack.c.bf16 %v253, %v252
          %v281 = vpack.c.bf16 %v255, %v254
          %v282 = vpack.c.bf16 %v257, %v256
          %v283 = vpack.c.bf16 %v259, %v258
          %v284 = vpack.c.bf16 %v261, %v260
          %v285 = vpack.c.bf16 %v263, %v262
          %v286 = vpack.c.bf16 %v265, %v264
          %v287 = vpack.c.bf16 %v267, %v266
          %v288 = vpack.c.bf16 %v269, %v268
          %v289 = vpack.c.bf16 %v271, %v270
          %v290 = vpack.c.bf16 %v273, %v272
          %v291 = vpack.c.bf16 %v275, %v274
          %v292 = vld [vmem:[%s171] sm:$0xf]
          %v293 = vld [vmem:[%s171 + $0x4] sm:$0xf]
          %v294 = vld [vmem:[%s171 + $0x8] sm:$0xf]
          %v295 = vld [vmem:[%s171 + $0xc] sm:$0xf]
          %v296 = vld [vmem:[%s171 + $0x10] sm:$0xf]
          %v297 = vld [vmem:[%s171 + $0x14] sm:$0xf]
          %v298 = vld [vmem:[%s171 + $0x18] sm:$0xf]
          %v299 = vld [vmem:[%s171 + $0x1c] sm:$0xf]
          %v300 = vld [vmem:[%s171 + $0x20] sm:$0xf]
          %v301 = vld [vmem:[%s171 + $0x24] sm:$0xf]
          %v302 = vld [vmem:[%s171 + $0x28] sm:$0xf]
          %v303 = vld [vmem:[%s171 + $0x2c] sm:$0xf]
          %v304 = vld [vmem:[%s171 + $0x30] sm:$0xf]
          %v305 = vld [vmem:[%s171 + $0x34] sm:$0xf]
          %v306 = vld [vmem:[%s171 + $0x38] sm:$0xf]
          %v307 = vld [vmem:[%s171 + $0x3c] sm:$0xf]
          %v324 = vunpack.c.l.b16 %v292
          %v325 = vunpack.c.l.b16 %v293
          %v326 = vunpack.c.l.b16 %v294
          %v327 = vunpack.c.l.b16 %v295
          %v328 = vunpack.c.l.b16 %v296
          %v329 = vunpack.c.l.b16 %v297
          %v330 = vunpack.c.l.b16 %v298
          %v331 = vunpack.c.l.b16 %v299
          %v332 = vunpack.c.l.b16 %v300
          %v333 = vunpack.c.l.b16 %v301
          %v334 = vunpack.c.l.b16 %v302
          %v335 = vunpack.c.l.b16 %v303
          %v336 = vunpack.c.l.b16 %v304
          %v337 = vunpack.c.l.b16 %v305
          %v338 = vunpack.c.l.b16 %v306
          %v339 = vunpack.c.l.b16 %v307
          %v340 = vpack.c.b16 %v325, %v324
          %v341 = vpack.c.b16 %v327, %v326
          %v342 = vpack.c.b16 %v329, %v328
          %v343 = vpack.c.b16 %v331, %v330
          %v344 = vpack.c.b16 %v333, %v332
          %v345 = vpack.c.b16 %v335, %v334
          %v346 = vpack.c.b16 %v337, %v336
          %v347 = vpack.c.b16 %v339, %v338
          %356 = vmatpush.bf16.msra.mxu0 %v347
          %357 = vmatpush.bf16.msra.mxu0 %v346
          %358 = vmatpush.bf16.msra.mxu0 %v345
          %359 = vmatpush.bf16.msra.mxu0 %v344
          %360 = vmatpush.bf16.msra.mxu0 %v343
          %361 = vmatpush.bf16.msra.mxu0 %v342
          %362 = vmatpush.bf16.msra.mxu0 %v341
          %363 = vmatpush.bf16.msra.mxu0 %v340
          %364 = vmatmul.bf16.gmra.mxu0 %v276
          %v365 = vpop.f32.mrf.mxu0
          %v366 = vadd.f32 0.0, %v365
          %v367 = vpop.f32.mrf.mxu0
          %v368 = vadd.f32 0.0, %v367
          %369 = vmatmul.bf16.gmra.mxu0 %v277
          %v370 = vpop.f32.mrf.mxu0
          %v371 = vadd.f32 0.0, %v370
          %v372 = vpop.f32.mrf.mxu0
          %v373 = vadd.f32 0.0, %v372
          %374 = vmatmul.bf16.gmra.mxu0 %v278
          %v375 = vpop.f32.mrf.mxu0
          %v376 = vadd.f32 0.0, %v375
          %v377 = vpop.f32.mrf.mxu0
          %v378 = vadd.f32 0.0, %v377
          %379 = vmatmul.bf16.gmra.mxu0 %v279
          %v380 = vpop.f32.mrf.mxu0
          %v381 = vadd.f32 0.0, %v380
          %v382 = vpop.f32.mrf.mxu0
          %v383 = vadd.f32 0.0, %v382
          %384 = vmatmul.bf16.gmra.mxu0 %v280
          %v385 = vpop.f32.mrf.mxu0
          %v386 = vadd.f32 0.0, %v385
          %v387 = vpop.f32.mrf.mxu0
          %v388 = vadd.f32 0.0, %v387
          %389 = vmatmul.bf16.gmra.mxu0 %v281
          %v390 = vpop.f32.mrf.mxu0
          %v391 = vadd.f32 0.0, %v390
          %v392 = vpop.f32.mrf.mxu0
          %v393 = vadd.f32 0.0, %v392
          %394 = vmatmul.bf16.gmra.mxu0 %v282
          %v395 = vpop.f32.mrf.mxu0
          %v396 = vadd.f32 0.0, %v395
          %v397 = vpop.f32.mrf.mxu0
          %v398 = vadd.f32 0.0, %v397
          %399 = vmatmul.bf16.gmra.mxu0 %v283
          %v400 = vpop.f32.mrf.mxu0
          %v401 = vadd.f32 0.0, %v400
          %v402 = vpop.f32.mrf.mxu0
          %v403 = vadd.f32 0.0, %v402
          %404 = vmatmul.bf16.gmra.mxu0 %v284
          %v405 = vpop.f32.mrf.mxu0
          %v406 = vadd.f32 0.0, %v405
          %v407 = vpop.f32.mrf.mxu0
          %v408 = vadd.f32 0.0, %v407
          %409 = vmatmul.bf16.gmra.mxu0 %v285
          %v410 = vpop.f32.mrf.mxu0
          %v411 = vadd.f32 0.0, %v410
          %v412 = vpop.f32.mrf.mxu0
          %v413 = vadd.f32 0.0, %v412
          %414 = vmatmul.bf16.gmra.mxu0 %v286
          %v415 = vpop.f32.mrf.mxu0
          %v416 = vadd.f32 0.0, %v415
          %v417 = vpop.f32.mrf.mxu0
          %v418 = vadd.f32 0.0, %v417
          %419 = vmatmul.bf16.gmra.mxu0 %v287
          %v420 = vpop.f32.mrf.mxu0
          %v421 = vadd.f32 0.0, %v420
          %v422 = vpop.f32.mrf.mxu0
          %v423 = vadd.f32 0.0, %v422
          %424 = vmatmul.bf16.gmra.mxu0 %v288
          %v425 = vpop.f32.mrf.mxu0
          %v426 = vadd.f32 0.0, %v425
          %v427 = vpop.f32.mrf.mxu0
          %v428 = vadd.f32 0.0, %v427
          %429 = vmatmul.bf16.gmra.mxu0 %v289
          %v430 = vpop.f32.mrf.mxu0
          %v431 = vadd.f32 0.0, %v430
          %v432 = vpop.f32.mrf.mxu0
          %v433 = vadd.f32 0.0, %v432
          %434 = vmatmul.bf16.gmra.mxu0 %v290
          %v435 = vpop.f32.mrf.mxu0
          %v436 = vadd.f32 0.0, %v435
          %v437 = vpop.f32.mrf.mxu0
          %v438 = vadd.f32 0.0, %v437
          %439 = vmatmul.bf16.gmra.mxu0 %v291
          %v440 = vpop.f32.mrf.mxu0
          %v441 = vadd.f32 0.0, %v440
          %v442 = vpop.f32.mrf.mxu0
          %v443 = vadd.f32 0.0, %v442
          %444 = vdwg.mxu0
          %v445 = vpack.c.bf16 %v366, %v366
          %v446 = vpack.c.bf16 %v368, %v368
          %v447 = vpack.c.bf16 %v371, %v371
          %v448 = vpack.c.bf16 %v373, %v373
          %v449 = vpack.c.bf16 %v376, %v376
          %v450 = vpack.c.bf16 %v378, %v378
          %v451 = vpack.c.bf16 %v381, %v381
          %v452 = vpack.c.bf16 %v383, %v383
          %v453 = vpack.c.bf16 %v386, %v386
          %v454 = vpack.c.bf16 %v388, %v388
          %v455 = vpack.c.bf16 %v391, %v391
          %v456 = vpack.c.bf16 %v393, %v393
          %v457 = vpack.c.bf16 %v396, %v396
          %v458 = vpack.c.bf16 %v398, %v398
          %v459 = vpack.c.bf16 %v401, %v401
          %v460 = vpack.c.bf16 %v403, %v403
          %v461 = vpack.c.bf16 %v406, %v406
          %v462 = vpack.c.bf16 %v408, %v408
          %v463 = vpack.c.bf16 %v411, %v411
          %v464 = vpack.c.bf16 %v413, %v413
          %v465 = vpack.c.bf16 %v416, %v416
          %v466 = vpack.c.bf16 %v418, %v418
          %v467 = vpack.c.bf16 %v421, %v421
          %v468 = vpack.c.bf16 %v423, %v423
          %v469 = vpack.c.bf16 %v426, %v426
          %v470 = vpack.c.bf16 %v428, %v428
          %v471 = vpack.c.bf16 %v431, %v431
          %v472 = vpack.c.bf16 %v433, %v433
          %v473 = vpack.c.bf16 %v436, %v436
          %v474 = vpack.c.bf16 %v438, %v438
          %v475 = vpack.c.bf16 %v441, %v441
          %v476 = vpack.c.bf16 %v443, %v443
          %477 = vst [vmem:[#allocation3] sm:$0xf] %v445
          %478 = vst [vmem:[#allocation3 + $0x4] sm:$0xf] %v446
          %479 = vst [vmem:[#allocation3 + $0x8] sm:$0xf] %v447
          %480 = vst [vmem:[#allocation3 + $0xc] sm:$0xf] %v448
          %481 = vst [vmem:[#allocation3 + $0x10] sm:$0xf] %v449
          %482 = vst [vmem:[#allocation3 + $0x14] sm:$0xf] %v450
          %483 = vst [vmem:[#allocation3 + $0x18] sm:$0xf] %v451
          %484 = vst [vmem:[#allocation3 + $0x1c] sm:$0xf] %v452
          %485 = vst [vmem:[#allocation3 + $0x20] sm:$0xf] %v453
          %486 = vst [vmem:[#allocation3 + $0x24] sm:$0xf] %v454
          %487 = vst [vmem:[#allocation3 + $0x28] sm:$0xf] %v455
          %488 = vst [vmem:[#allocation3 + $0x2c] sm:$0xf] %v456
          %489 = vst [vmem:[#allocation3 + $0x30] sm:$0xf] %v457
          %490 = vst [vmem:[#allocation3 + $0x34] sm:$0xf] %v458
          %491 = vst [vmem:[#allocation3 + $0x38] sm:$0xf] %v459
          %492 = vst [vmem:[#allocation3 + $0x3c] sm:$0xf] %v460
          %493 = vst [vmem:[#allocation3 + $0x40] sm:$0xf] %v461
          %494 = vst [vmem:[#allocation3 + $0x44] sm:$0xf] %v462
          %495 = vst [vmem:[#allocation3 + $0x48] sm:$0xf] %v463
          %496 = vst [vmem:[#allocation3 + $0x4c] sm:$0xf] %v464
          %497 = vst [vmem:[#allocation3 + $0x50] sm:$0xf] %v465
          %498 = vst [vmem:[#allocation3 + $0x54] sm:$0xf] %v466
          %499 = vst [vmem:[#allocation3 + $0x58] sm:$0xf] %v467
          %500 = vst [vmem:[#allocation3 + $0x5c] sm:$0xf] %v468
          %501 = vst [vmem:[#allocation3 + $0x60] sm:$0xf] %v469
          %502 = vst [vmem:[#allocation3 + $0x64] sm:$0xf] %v470
          %503 = vst [vmem:[#allocation3 + $0x68] sm:$0xf] %v471
          %504 = vst [vmem:[#allocation3 + $0x6c] sm:$0xf] %v472
          %505 = vst [vmem:[#allocation3 + $0x70] sm:$0xf] %v473
          %506 = vst [vmem:[#allocation3 + $0x74] sm:$0xf] %v474
          %507 = vst [vmem:[#allocation3 + $0x78] sm:$0xf] %v475
          %508 = vst [vmem:[#allocation3 + $0x7c] sm:$0xf] %v476
        $region52: #{tpu_custom_call.1} parent=27 // pred_fallthru
          _
        %s509 = smul.u32 %s27, 256
        %s510 = sshra.s32 %s509, 3
        %s511 = sand.u32 %s509, 7
        %s512 = smul.u32 %s510, 2
        %s513 = smul.addr %s512, 4
        %s514 = scalar_lea.vmem [#allocation2], %s513
        %v515 = vld [vmem:[%s514] sm:$0xff]
        %v516 = vld [vmem:[%s514 + $0x8] sm:$0xff]
        %v517 = vld [vmem:[%s514 + $0x10] sm:$0xff]
        %v518 = vld [vmem:[%s514 + $0x18] sm:$0xff]
        %v519 = vld [vmem:[%s514 + $0x20] sm:$0xff]
        %v520 = vld [vmem:[%s514 + $0x28] sm:$0xff]
        %v521 = vld [vmem:[%s514 + $0x30] sm:$0xff]
        %v522 = vld [vmem:[%s514 + $0x38] sm:$0xff]
        %v523 = vld [vmem:[%s514 + $0x40] sm:$0xff]
        %v524 = vld [vmem:[%s514 + $0x48] sm:$0xff]
        %v525 = vld [vmem:[%s514 + $0x50] sm:$0xff]
        %v526 = vld [vmem:[%s514 + $0x58] sm:$0xff]
        %v527 = vld [vmem:[%s514 + $0x60] sm:$0xff]
        %v528 = vld [vmem:[%s514 + $0x68] sm:$0xff]
        %v529 = vld [vmem:[%s514 + $0x70] sm:$0xff]
        %v530 = vld [vmem:[%s514 + $0x78] sm:$0xff]
        %v531 = vld [vmem:[%s514 + $0x80] sm:$0xff]
        %v532 = vld [vmem:[%s514 + $0x88] sm:$0xff]
        %v533 = vld [vmem:[%s514 + $0x90] sm:$0xff]
        %v534 = vld [vmem:[%s514 + $0x98] sm:$0xff]
        %v535 = vld [vmem:[%s514 + $0xa0] sm:$0xff]
        %v536 = vld [vmem:[%s514 + $0xa8] sm:$0xff]
        %v537 = vld [vmem:[%s514 + $0xb0] sm:$0xff]
        %v538 = vld [vmem:[%s514 + $0xb8] sm:$0xff]
        %v539 = vld [vmem:[%s514 + $0xc0] sm:$0xff]
        %v540 = vld [vmem:[%s514 + $0xc8] sm:$0xff]
        %v541 = vld [vmem:[%s514 + $0xd0] sm:$0xff]
        %v542 = vld [vmem:[%s514 + $0xd8] sm:$0xff]
        %v543 = vld [vmem:[%s514 + $0xe0] sm:$0xff]
        %v544 = vld [vmem:[%s514 + $0xe8] sm:$0xff]
        %v545 = vld [vmem:[%s514 + $0xf0] sm:$0xff]
        %v546 = vld [vmem:[%s514 + $0xf8] sm:$0xff]
        %v547 = vld [vmem:[#allocation3] sm:$0xf]
        %v548 = vld [vmem:[#allocation3 + $0x4] sm:$0xf]
        %v549 = vld [vmem:[#allocation3 + $0x8] sm:$0xf]
        %v550 = vld [vmem:[#allocation3 + $0xc] sm:$0xf]
        %v551 = vld [vmem:[#allocation3 + $0x10] sm:$0xf]
        %v552 = vld [vmem:[#allocation3 + $0x14] sm:$0xf]
        %v553 = vld [vmem:[#allocation3 + $0x18] sm:$0xf]
        %v554 = vld [vmem:[#allocation3 + $0x1c] sm:$0xf]
        %v555 = vld [vmem:[#allocation3 + $0x20] sm:$0xf]
        %v556 = vld [vmem:[#allocation3 + $0x24] sm:$0xf]
        %v557 = vld [vmem:[#allocation3 + $0x28] sm:$0xf]
        %v558 = vld [vmem:[#allocation3 + $0x2c] sm:$0xf]
        %v559 = vld [vmem:[#allocation3 + $0x30] sm:$0xf]
        %v560 = vld [vmem:[#allocation3 + $0x34] sm:$0xf]
        %v561 = vld [vmem:[#allocation3 + $0x38] sm:$0xf]
        %v562 = vld [vmem:[#allocation3 + $0x3c] sm:$0xf]
        %v563 = vld [vmem:[#allocation3 + $0x40] sm:$0xf]
        %v564 = vld [vmem:[#allocation3 + $0x44] sm:$0xf]
        %v565 = vld [vmem:[#allocation3 + $0x48] sm:$0xf]
        %v566 = vld [vmem:[#allocation3 + $0x4c] sm:$0xf]
        %v567 = vld [vmem:[#allocation3 + $0x50] sm:$0xf]
        %v568 = vld [vmem:[#allocation3 + $0x54] sm:$0xf]
        %v569 = vld [vmem:[#allocation3 + $0x58] sm:$0xf]
        %v570 = vld [vmem:[#allocation3 + $0x5c] sm:$0xf]
        %v571 = vld [vmem:[#allocation3 + $0x60] sm:$0xf]
        %v572 = vld [vmem:[#allocation3 + $0x64] sm:$0xf]
        %v573 = vld [vmem:[#allocation3 + $0x68] sm:$0xf]
        %v574 = vld [vmem:[#allocation3 + $0x6c] sm:$0xf]
        %v575 = vld [vmem:[#allocation3 + $0x70] sm:$0xf]
        %v576 = vld [vmem:[#allocation3 + $0x74] sm:$0xf]
        %v577 = vld [vmem:[#allocation3 + $0x78] sm:$0xf]
        %v578 = vld [vmem:[#allocation3 + $0x7c] sm:$0xf]
        %v579 = vld [vmem:[%s180] sm:$0x1]
        %v581 = vperm.slane %v579, 0
        %v615 = vunpack.c.l.b16 %v515
        %v616 = vunpack.c.h.b16 %v515
        %v617 = vunpack.c.l.b16 %v516
        %v618 = vunpack.c.h.b16 %v516
        %v619 = vunpack.c.l.b16 %v517
        %v620 = vunpack.c.h.b16 %v517
        %v621 = vunpack.c.l.b16 %v518
        %v622 = vunpack.c.h.b16 %v518
        %v623 = vunpack.c.l.b16 %v519
        %v624 = vunpack.c.h.b16 %v519
        %v625 = vunpack.c.l.b16 %v520
        %v626 = vunpack.c.h.b16 %v520
        %v627 = vunpack.c.l.b16 %v521
        %v628 = vunpack.c.h.b16 %v521
        %v629 = vunpack.c.l.b16 %v522
        %v630 = vunpack.c.h.b16 %v522
        %v631 = vunpack.c.l.b16 %v523
        %v632 = vunpack.c.h.b16 %v523
        %v633 = vunpack.c.l.b16 %v524
        %v634 = vunpack.c.h.b16 %v524
        %v635 = vunpack.c.l.b16 %v525
        %v636 = vunpack.c.h.b16 %v525
        %v637 = vunpack.c.l.b16 %v526
        %v638 = vunpack.c.h.b16 %v526
        %v639 = vunpack.c.l.b16 %v527
        %v640 = vunpack.c.h.b16 %v527
        %v641 = vunpack.c.l.b16 %v528
        %v642 = vunpack.c.h.b16 %v528
        %v643 = vunpack.c.l.b16 %v529
        %v644 = vunpack.c.h.b16 %v529
        %v645 = vunpack.c.l.b16 %v530
        %v646 = vunpack.c.h.b16 %v530
        %v647 = vunpack.c.l.b16 %v531
        %v648 = vunpack.c.h.b16 %v531
        %v649 = vunpack.c.l.b16 %v532
        %v650 = vunpack.c.h.b16 %v532
        %v651 = vunpack.c.l.b16 %v533
        %v652 = vunpack.c.h.b16 %v533
        %v653 = vunpack.c.l.b16 %v534
        %v654 = vunpack.c.h.b16 %v534
        %v655 = vunpack.c.l.b16 %v535
        %v656 = vunpack.c.h.b16 %v535
        %v657 = vunpack.c.l.b16 %v536
        %v658 = vunpack.c.h.b16 %v536
        %v659 = vunpack.c.l.b16 %v537
        %v660 = vunpack.c.h.b16 %v537
        %v661 = vunpack.c.l.b16 %v538
        %v662 = vunpack.c.h.b16 %v538
        %v663 = vunpack.c.l.b16 %v539
        %v664 = vunpack.c.h.b16 %v539
        %v665 = vunpack.c.l.b16 %v540
        %v666 = vunpack.c.h.b16 %v540
        %v667 = vunpack.c.l.b16 %v541
        %v668 = vunpack.c.h.b16 %v541
        %v669 = vunpack.c.l.b16 %v542
        %v670 = vunpack.c.h.b16 %v542
        %v671 = vunpack.c.l.b16 %v543
        %v672 = vunpack.c.h.b16 %v543
        %v673 = vunpack.c.l.b16 %v544
        %v674 = vunpack.c.h.b16 %v544
        %v675 = vunpack.c.l.b16 %v545
        %v676 = vunpack.c.h.b16 %v545
        %v677 = vunpack.c.l.b16 %v546
        %v678 = vunpack.c.h.b16 %v546
        %v679 = vpack.c.b16 %v617, %v615
        %v680 = vpack.c.b16 %v618, %v616
        %v681 = vpack.c.b16 %v621, %v619
        %v682 = vpack.c.b16 %v622, %v620
        %v683 = vpack.c.b16 %v625, %v623
        %v684 = vpack.c.b16 %v626, %v624
        %v685 = vpack.c.b16 %v629, %v627
        %v686 = vpack.c.b16 %v630, %v628
        %v687 = vpack.c.b16 %v633, %v631
        %v688 = vpack.c.b16 %v634, %v632
        %v689 = vpack.c.b16 %v637, %v635
        %v690 = vpack.c.b16 %v638, %v636
        %v691 = vpack.c.b16 %v641, %v639
        %v692 = vpack.c.b16 %v642, %v640
        %v693 = vpack.c.b16 %v645, %v643
        %v694 = vpack.c.b16 %v646, %v644
        %v695 = vpack.c.b16 %v649, %v647
        %v696 = vpack.c.b16 %v650, %v648
        %v697 = vpack.c.b16 %v653, %v651
        %v698 = vpack.c.b16 %v654, %v652
        %v699 = vpack.c.b16 %v657, %v655
        %v700 = vpack.c.b16 %v658, %v656
        %v701 = vpack.c.b16 %v661, %v659
        %v702 = vpack.c.b16 %v662, %v660
        %v703 = vpack.c.b16 %v665, %v663
        %v704 = vpack.c.b16 %v666, %v664
        %v705 = vpack.c.b16 %v669, %v667
        %v706 = vpack.c.b16 %v670, %v668
        %v707 = vpack.c.b16 %v673, %v671
        %v708 = vpack.c.b16 %v674, %v672
        %v709 = vpack.c.b16 %v677, %v675
        %v710 = vpack.c.b16 %v678, %v676
        %v775 = vunpack.c.l.b16 %v547
        %v776 = vunpack.c.l.b16 %v548
        %v777 = vunpack.c.l.b16 %v549
        %v778 = vunpack.c.l.b16 %v550
        %v779 = vunpack.c.l.b16 %v551
        %v780 = vunpack.c.l.b16 %v552
        %v781 = vunpack.c.l.b16 %v553
        %v782 = vunpack.c.l.b16 %v554
        %v783 = vunpack.c.l.b16 %v555
        %v784 = vunpack.c.l.b16 %v556
        %v785 = vunpack.c.l.b16 %v557
        %v786 = vunpack.c.l.b16 %v558
        %v787 = vunpack.c.l.b16 %v559
        %v788 = vunpack.c.l.b16 %v560
        %v789 = vunpack.c.l.b16 %v561
        %v790 = vunpack.c.l.b16 %v562
        %v791 = vunpack.c.l.b16 %v563
        %v792 = vunpack.c.l.b16 %v564
        %v793 = vunpack.c.l.b16 %v565
        %v794 = vunpack.c.l.b16 %v566
        %v795 = vunpack.c.l.b16 %v567
        %v796 = vunpack.c.l.b16 %v568
        %v797 = vunpack.c.l.b16 %v569
        %v798 = vunpack.c.l.b16 %v570
        %v799 = vunpack.c.l.b16 %v571
        %v800 = vunpack.c.l.b16 %v572
        %v801 = vunpack.c.l.b16 %v573
        %v802 = vunpack.c.l.b16 %v574
        %v803 = vunpack.c.l.b16 %v575
        %v804 = vunpack.c.l.b16 %v576
        %v805 = vunpack.c.l.b16 %v577
        %v806 = vunpack.c.l.b16 %v578
        %v807 = vpack.c.b16 %v776, %v775
        %v808 = vpack.c.b16 %v778, %v777
        %v809 = vpack.c.b16 %v780, %v779
        %v810 = vpack.c.b16 %v782, %v781
        %v811 = vpack.c.b16 %v784, %v783
        %v812 = vpack.c.b16 %v786, %v785
        %v813 = vpack.c.b16 %v788, %v787
        %v814 = vpack.c.b16 %v790, %v789
        %v815 = vpack.c.b16 %v792, %v791
        %v816 = vpack.c.b16 %v794, %v793
        %v817 = vpack.c.b16 %v796, %v795
        %v818 = vpack.c.b16 %v798, %v797
        %v819 = vpack.c.b16 %v800, %v799
        %v820 = vpack.c.b16 %v802, %v801
        %v821 = vpack.c.b16 %v804, %v803
        %v822 = vpack.c.b16 %v806, %v805
        %839 = vmatpush.bf16.msra.mxu0 %v814
        %840 = vmatpush.bf16.msra.mxu0 %v813
        %841 = vmatpush.bf16.msra.mxu0 %v812
        %842 = vmatpush.bf16.msra.mxu0 %v811
        %843 = vmatpush.bf16.msra.mxu0 %v810
        %844 = vmatpush.bf16.msra.mxu0 %v809
        %845 = vmatpush.bf16.msra.mxu0 %v808
        %846 = vmatpush.bf16.msra.mxu0 %v807
        %847 = vmatmul.bf16.gmra.mxu0 %v679
        %v848 = vpop.f32.mrf.mxu0
        %v849 = vadd.f32 %v581, %v848
        %v850 = vpop.f32.mrf.mxu0
        %v851 = vadd.f32 %v581, %v850
        %852 = vmatmul.bf16.gmra.mxu0 %v681
        %v853 = vpop.f32.mrf.mxu0
        %v854 = vadd.f32 %v581, %v853
        %v855 = vpop.f32.mrf.mxu0
        %v856 = vadd.f32 %v581, %v855
        %857 = vmatmul.bf16.gmra.mxu0 %v683
        %v858 = vpop.f32.mrf.mxu0
        %v859 = vadd.f32 %v581, %v858
        %v860 = vpop.f32.mrf.mxu0
        %v861 = vadd.f32 %v581, %v860
        %862 = vmatmul.bf16.gmra.mxu0 %v685
        %v863 = vpop.f32.mrf.mxu0
        %v864 = vadd.f32 %v581, %v863
        %v865 = vpop.f32.mrf.mxu0
        %v866 = vadd.f32 %v581, %v865
        %867 = vmatmul.bf16.gmra.mxu0 %v687
        %v868 = vpop.f32.mrf.mxu0
        %v869 = vadd.f32 %v581, %v868
        %v870 = vpop.f32.mrf.mxu0
        %v871 = vadd.f32 %v581, %v870
        %872 = vmatmul.bf16.gmra.mxu0 %v689
        %v873 = vpop.f32.mrf.mxu0
        %v874 = vadd.f32 %v581, %v873
        %v875 = vpop.f32.mrf.mxu0
        %v876 = vadd.f32 %v581, %v875
        %877 = vmatmul.bf16.gmra.mxu0 %v691
        %v878 = vpop.f32.mrf.mxu0
        %v879 = vadd.f32 %v581, %v878
        %v880 = vpop.f32.mrf.mxu0
        %v881 = vadd.f32 %v581, %v880
        %882 = vmatmul.bf16.gmra.mxu0 %v693
        %v883 = vpop.f32.mrf.mxu0
        %v884 = vadd.f32 %v581, %v883
        %v885 = vpop.f32.mrf.mxu0
        %v886 = vadd.f32 %v581, %v885
        %887 = vmatmul.bf16.gmra.mxu0 %v695
        %v888 = vpop.f32.mrf.mxu0
        %v889 = vadd.f32 %v581, %v888
        %v890 = vpop.f32.mrf.mxu0
        %v891 = vadd.f32 %v581, %v890
        %892 = vmatmul.bf16.gmra.mxu0 %v697
        %v893 = vpop.f32.mrf.mxu0
        %v894 = vadd.f32 %v581, %v893
        %v895 = vpop.f32.mrf.mxu0
        %v896 = vadd.f32 %v581, %v895
        %897 = vmatmul.bf16.gmra.mxu0 %v699
        %v898 = vpop.f32.mrf.mxu0
        %v899 = vadd.f32 %v581, %v898
        %v900 = vpop.f32.mrf.mxu0
        %v901 = vadd.f32 %v581, %v900
        %902 = vmatmul.bf16.gmra.mxu0 %v701
        %v903 = vpop.f32.mrf.mxu0
        %v904 = vadd.f32 %v581, %v903
        %v905 = vpop.f32.mrf.mxu0
        %v906 = vadd.f32 %v581, %v905
        %907 = vmatmul.bf16.gmra.mxu0 %v703
        %v908 = vpop.f32.mrf.mxu0
        %v909 = vadd.f32 %v581, %v908
        %v910 = vpop.f32.mrf.mxu0
        %v911 = vadd.f32 %v581, %v910
        %912 = vmatmul.bf16.gmra.mxu0 %v705
        %v913 = vpop.f32.mrf.mxu0
        %v914 = vadd.f32 %v581, %v913
        %v915 = vpop.f32.mrf.mxu0
        %v916 = vadd.f32 %v581, %v915
        %917 = vmatmul.bf16.gmra.mxu0 %v707
        %v918 = vpop.f32.mrf.mxu0
        %v919 = vadd.f32 %v581, %v918
        %v920 = vpop.f32.mrf.mxu0
        %v921 = vadd.f32 %v581, %v920
        %922 = vmatmul.bf16.gmra.mxu0 %v709
        %v923 = vpop.f32.mrf.mxu0
        %v924 = vadd.f32 %v581, %v923
        %v925 = vpop.f32.mrf.mxu0
        %v926 = vadd.f32 %v581, %v925
        %927 = vdwg.mxu0
        %928 = vmatpush.bf16.msra.mxu0 %v822
        %929 = vmatpush.bf16.msra.mxu0 %v821
        %930 = vmatpush.bf16.msra.mxu0 %v820
        %931 = vmatpush.bf16.msra.mxu0 %v819
        %932 = vmatpush.bf16.msra.mxu0 %v818
        %933 = vmatpush.bf16.msra.mxu0 %v817
        %934 = vmatpush.bf16.msra.mxu0 %v816
        %935 = vmatpush.bf16.msra.mxu0 %v815
        %936 = vmatmul.bf16.gmra.mxu0 %v680
        %v937 = vpop.f32.mrf.mxu0
        %v938 = vadd.f32 %v849, %v937
        %v939 = vpop.f32.mrf.mxu0
        %v940 = vadd.f32 %v851, %v939
        %941 = vmatmul.bf16.gmra.mxu0 %v682
        %v942 = vpop.f32.mrf.mxu0
        %v943 = vadd.f32 %v854, %v942
        %v944 = vpop.f32.mrf.mxu0
        %v945 = vadd.f32 %v856, %v944
        %946 = vmatmul.bf16.gmra.mxu0 %v684
        %v947 = vpop.f32.mrf.mxu0
        %v948 = vadd.f32 %v859, %v947
        %v949 = vpop.f32.mrf.mxu0
        %v950 = vadd.f32 %v861, %v949
        %951 = vmatmul.bf16.gmra.mxu0 %v686
        %v952 = vpop.f32.mrf.mxu0
        %v953 = vadd.f32 %v864, %v952
        %v954 = vpop.f32.mrf.mxu0
        %v955 = vadd.f32 %v866, %v954
        %956 = vmatmul.bf16.gmra.mxu0 %v688
        %v957 = vpop.f32.mrf.mxu0
        %v958 = vadd.f32 %v869, %v957
        %v959 = vpop.f32.mrf.mxu0
        %v960 = vadd.f32 %v871, %v959
        %961 = vmatmul.bf16.gmra.mxu0 %v690
        %v962 = vpop.f32.mrf.mxu0
        %v963 = vadd.f32 %v874, %v962
        %v964 = vpop.f32.mrf.mxu0
        %v965 = vadd.f32 %v876, %v964
        %966 = vmatmul.bf16.gmra.mxu0 %v692
        %v967 = vpop.f32.mrf.mxu0
        %v968 = vadd.f32 %v879, %v967
        %v969 = vpop.f32.mrf.mxu0
        %v970 = vadd.f32 %v881, %v969
        %971 = vmatmul.bf16.gmra.mxu0 %v694
        %v972 = vpop.f32.mrf.mxu0
        %v973 = vadd.f32 %v884, %v972
        %v974 = vpop.f32.mrf.mxu0
        %v975 = vadd.f32 %v886, %v974
        %976 = vmatmul.bf16.gmra.mxu0 %v696
        %v977 = vpop.f32.mrf.mxu0
        %v978 = vadd.f32 %v889, %v977
        %v979 = vpop.f32.mrf.mxu0
        %v980 = vadd.f32 %v891, %v979
        %981 = vmatmul.bf16.gmra.mxu0 %v698
        %v982 = vpop.f32.mrf.mxu0
        %v983 = vadd.f32 %v894, %v982
        %v984 = vpop.f32.mrf.mxu0
        %v985 = vadd.f32 %v896, %v984
        %986 = vmatmul.bf16.gmra.mxu0 %v700
        %v987 = vpop.f32.mrf.mxu0
        %v988 = vadd.f32 %v899, %v987
        %v989 = vpop.f32.mrf.mxu0
        %v990 = vadd.f32 %v901, %v989
        %991 = vmatmul.bf16.gmra.mxu0 %v702
        %v992 = vpop.f32.mrf.mxu0
        %v993 = vadd.f32 %v904, %v992
        %v994 = vpop.f32.mrf.mxu0
        %v995 = vadd.f32 %v906, %v994
        %996 = vmatmul.bf16.gmra.mxu0 %v704
        %v997 = vpop.f32.mrf.mxu0
        %v998 = vadd.f32 %v909, %v997
        %v999 = vpop.f32.mrf.mxu0
        %v1000 = vadd.f32 %v911, %v999
        %1001 = vmatmul.bf16.gmra.mxu0 %v706
        %v1002 = vpop.f32.mrf.mxu0
        %v1003 = vadd.f32 %v914, %v1002
        %v1004 = vpop.f32.mrf.mxu0
        %v1005 = vadd.f32 %v916, %v1004
        %1006 = vmatmul.bf16.gmra.mxu0 %v708
        %v1007 = vpop.f32.mrf.mxu0
        %v1008 = vadd.f32 %v919, %v1007
        %v1009 = vpop.f32.mrf.mxu0
        %v1010 = vadd.f32 %v921, %v1009
        %1011 = vmatmul.bf16.gmra.mxu0 %v710
        %v1012 = vpop.f32.mrf.mxu0
        %v1013 = vadd.f32 %v924, %v1012
        %v1014 = vpop.f32.mrf.mxu0
        %v1015 = vadd.f32 %v926, %v1014
        %1016 = vdwg.mxu0
        %p1017 = scmp.lt.s32.totalorder %s26, 2
        // Predicated region
        $region53: #{tpu_custom_call.1} parent=27 // pred_check
          %p1018 = pneg %p1017
        $region54: #{tpu_custom_call.1} parent=27 // pred_check_branch
          %1020 = sbr.rel (%p1018) target = $region56
        $region55: #{tpu_custom_call.1} parent=27 // pred_region
          %v1021 = vmax.f32 %v938, 0.0
          %v1022 = vmax.f32 %v940, 0.0
          %v1023 = vmax.f32 %v943, 0.0
          %v1024 = vmax.f32 %v945, 0.0
          %v1025 = vmax.f32 %v948, 0.0
          %v1026 = vmax.f32 %v950, 0.0
          %v1027 = vmax.f32 %v953, 0.0
          %v1028 = vmax.f32 %v955, 0.0
          %v1029 = vmax.f32 %v958, 0.0
          %v1030 = vmax.f32 %v960, 0.0
          %v1031 = vmax.f32 %v963, 0.0
          %v1032 = vmax.f32 %v965, 0.0
          %v1033 = vmax.f32 %v968, 0.0
          %v1034 = vmax.f32 %v970, 0.0
          %v1035 = vmax.f32 %v973, 0.0
          %v1036 = vmax.f32 %v975, 0.0
          %v1037 = vmax.f32 %v978, 0.0
          %v1038 = vmax.f32 %v980, 0.0
          %v1039 = vmax.f32 %v983, 0.0
          %v1040 = vmax.f32 %v985, 0.0
          %v1041 = vmax.f32 %v988, 0.0
          %v1042 = vmax.f32 %v990, 0.0
          %v1043 = vmax.f32 %v993, 0.0
          %v1044 = vmax.f32 %v995, 0.0
          %v1045 = vmax.f32 %v998, 0.0
          %v1046 = vmax.f32 %v1000, 0.0
          %v1047 = vmax.f32 %v1003, 0.0
          %v1048 = vmax.f32 %v1005, 0.0
          %v1049 = vmax.f32 %v1008, 0.0
          %v1050 = vmax.f32 %v1010, 0.0
          %v1051 = vmax.f32 %v1013, 0.0
          %v1052 = vmax.f32 %v1015, 0.0
          %s1053 = scalar_lea.vmem [#allocation10], %s509
          %1054 = vst [vmem:[%s1053] sm:$0xff] %v1021
          %1055 = vst [vmem:[%s1053 + $0x8] sm:$0xff] %v1022
          %1056 = vst [vmem:[%s1053 + $0x10] sm:$0xff] %v1023
          %1057 = vst [vmem:[%s1053 + $0x18] sm:$0xff] %v1024
          %1058 = vst [vmem:[%s1053 + $0x20] sm:$0xff] %v1025
          %1059 = vst [vmem:[%s1053 + $0x28] sm:$0xff] %v1026
          %1060 = vst [vmem:[%s1053 + $0x30] sm:$0xff] %v1027
          %1061 = vst [vmem:[%s1053 + $0x38] sm:$0xff] %v1028
          %1062 = vst [vmem:[%s1053 + $0x40] sm:$0xff] %v1029
          %1063 = vst [vmem:[%s1053 + $0x48] sm:$0xff] %v1030
          %1064 = vst [vmem:[%s1053 + $0x50] sm:$0xff] %v1031
          %1065 = vst [vmem:[%s1053 + $0x58] sm:$0xff] %v1032
          %1066 = vst [vmem:[%s1053 + $0x60] sm:$0xff] %v1033
          %1067 = vst [vmem:[%s1053 + $0x68] sm:$0xff] %v1034
          %1068 = vst [vmem:[%s1053 + $0x70] sm:$0xff] %v1035
          %1069 = vst [vmem:[%s1053 + $0x78] sm:$0xff] %v1036
          %1070 = vst [vmem:[%s1053 + $0x80] sm:$0xff] %v1037
          %1071 = vst [vmem:[%s1053 + $0x88] sm:$0xff] %v1038
          %1072 = vst [vmem:[%s1053 + $0x90] sm:$0xff] %v1039
          %1073 = vst [vmem:[%s1053 + $0x98] sm:$0xff] %v1040
          %1074 = vst [vmem:[%s1053 + $0xa0] sm:$0xff] %v1041
          %1075 = vst [vmem:[%s1053 + $0xa8] sm:$0xff] %v1042
          %1076 = vst [vmem:[%s1053 + $0xb0] sm:$0xff] %v1043
          %1077 = vst [vmem:[%s1053 + $0xb8] sm:$0xff] %v1044
          %1078 = vst [vmem:[%s1053 + $0xc0] sm:$0xff] %v1045
          %1079 = vst [vmem:[%s1053 + $0xc8] sm:$0xff] %v1046
          %1080 = vst [vmem:[%s1053 + $0xd0] sm:$0xff] %v1047
          %1081 = vst [vmem:[%s1053 + $0xd8] sm:$0xff] %v1048
          %1082 = vst [vmem:[%s1053 + $0xe0] sm:$0xff] %v1049
          %1083 = vst [vmem:[%s1053 + $0xe8] sm:$0xff] %v1050
          %1084 = vst [vmem:[%s1053 + $0xf0] sm:$0xff] %v1051
          %1085 = vst [vmem:[%s1053 + $0xf8] sm:$0xff] %v1052
        $region56: #{tpu_custom_call.1} parent=27 // pred_fallthru
          _
        %p1086 = scmp.eq.s32.totalorder %s26, 2
        // Predicated region
        $region57: #{tpu_custom_call.1} parent=27 // pred_check
          %p1087 = pneg %p1086
        $region58: #{tpu_custom_call.1} parent=27 // pred_check_branch
          %1089 = sbr.rel (%p1087) target = $region60
        $region59: #{tpu_custom_call.1} parent=27 // pred_region
          %s1090 = scalar_lea.vmem [#allocation10], %s509
          %1091 = vst [vmem:[%s1090] sm:$0xff] %v938
          %1092 = vst [vmem:[%s1090 + $0x8] sm:$0xff] %v940
          %1093 = vst [vmem:[%s1090 + $0x10] sm:$0xff] %v943
          %1094 = vst [vmem:[%s1090 + $0x18] sm:$0xff] %v945
          %1095 = vst [vmem:[%s1090 + $0x20] sm:$0xff] %v948
          %1096 = vst [vmem:[%s1090 + $0x28] sm:$0xff] %v950
          %1097 = vst [vmem:[%s1090 + $0x30] sm:$0xff] %v953
          %1098 = vst [vmem:[%s1090 + $0x38] sm:$0xff] %v955
          %1099 = vst [vmem:[%s1090 + $0x40] sm:$0xff] %v958
          %1100 = vst [vmem:[%s1090 + $0x48] sm:$0xff] %v960
          %1101 = vst [vmem:[%s1090 + $0x50] sm:$0xff] %v963
          %1102 = vst [vmem:[%s1090 + $0x58] sm:$0xff] %v965
          %1103 = vst [vmem:[%s1090 + $0x60] sm:$0xff] %v968
          %1104 = vst [vmem:[%s1090 + $0x68] sm:$0xff] %v970
          %1105 = vst [vmem:[%s1090 + $0x70] sm:$0xff] %v973
          %1106 = vst [vmem:[%s1090 + $0x78] sm:$0xff] %v975
          %1107 = vst [vmem:[%s1090 + $0x80] sm:$0xff] %v978
          %1108 = vst [vmem:[%s1090 + $0x88] sm:$0xff] %v980
          %1109 = vst [vmem:[%s1090 + $0x90] sm:$0xff] %v983
          %1110 = vst [vmem:[%s1090 + $0x98] sm:$0xff] %v985
          %1111 = vst [vmem:[%s1090 + $0xa0] sm:$0xff] %v988
          %1112 = vst [vmem:[%s1090 + $0xa8] sm:$0xff] %v990
          %1113 = vst [vmem:[%s1090 + $0xb0] sm:$0xff] %v993
          %1114 = vst [vmem:[%s1090 + $0xb8] sm:$0xff] %v995
          %1115 = vst [vmem:[%s1090 + $0xc0] sm:$0xff] %v998
          %1116 = vst [vmem:[%s1090 + $0xc8] sm:$0xff] %v1000
          %1117 = vst [vmem:[%s1090 + $0xd0] sm:$0xff] %v1003
          %1118 = vst [vmem:[%s1090 + $0xd8] sm:$0xff] %v1005
          %1119 = vst [vmem:[%s1090 + $0xe0] sm:$0xff] %v1008
          %1120 = vst [vmem:[%s1090 + $0xe8] sm:$0xff] %v1010
          %1121 = vst [vmem:[%s1090 + $0xf0] sm:$0xff] %v1013
          %1122 = vst [vmem:[%s1090 + $0xf8] sm:$0xff] %v1015
        $region60: #{tpu_custom_call.1} parent=27 // pred_fallthru
          _
        // Predicated region
        $region61: #{tpu_custom_call.1} parent=27 // pred_check
          %p1123 = pneg %p99
        $region62: #{tpu_custom_call.1} parent=27 // pred_check_branch
          %1125 = sbr.rel (%p1123) target = $region64
        $region63: #{tpu_custom_call.1} parent=27 // pred_region
          %1127 = vsyncadd [#allocation7], 0
          %s1128 = sshll.u32 [#allocation10], 4
          %s1129 = int_to_ptr.vmem [resolvable:$true] %s1128
          %s1130 = sshll.u32 %s4, 4
          %s1131 = int_to_ptr.hbm [resolvable:$true] %s1130
          %1136 = dma.vmem_to_hbm [thread:$0]  %s1129, 4096, %s1131, [#allocation7], 128, 128, 8
        $region64: #{tpu_custom_call.1} parent=27 // pred_fallthru
          _
        // Predicated region
        $region65: #{tpu_custom_call.1} parent=27 // pred_check
          %p1137 = pneg %p99
        $region66: #{tpu_custom_call.1} parent=27 // pred_check_branch
          %1139 = sbr.rel (%p1137) target = $region68
        $region67: #{tpu_custom_call.1} parent=27 // pred_region
          %1141 = dma.done [#allocation7], 4096
        $region68: #{tpu_custom_call.1} parent=27 // pred_fallthru
          _
      $region28: #{tpu_custom_call.1} parent=5 // pred_fallthru
        _
      %p1142 = scmp.le.s32.totalorder 2, %s17
      // Predicated region
      $region69: #{tpu_custom_call.1} parent=5 // pred_check
        %p1143 = pneg %p1142
      $region70: #{tpu_custom_call.1} parent=5 // pred_check_branch
        %1145 = sbr.rel (%p1143) target = $region72
      $region71: #{tpu_custom_call.1} parent=5 // pred_region
        %s1146 = ssub.s32 %s17, 2
      $region72: #{tpu_custom_call.1} parent=5 // pred_fallthru
        _
    $region6: #{tpu_custom_call.1} parent=1 // loop_footer
      %s21 = sadd.s32 1, %s17
    $region7: #{tpu_custom_call.1} parent=1 // loop_footer_branch
      %16 = sbr.rel target = $region3
    $region8: #{tpu_custom_call.1} parent=1 // loop_exit
      _
    %1147 = vsyncpa [#allocation6], 1
    %s1148 = scalar_lea.sflag [#allocation6], 1
    %1149 = vsyncpa %s1148, 1
    %1150 = vsyncpa [#allocation9], 1
    %s1151 = scalar_lea.sflag [#allocation9], 1
    %1152 = vsyncpa %s1151, 1
    %1153 = vsyncpa [#allocation7], 1
    %s1154 = scalar_lea.sflag [#allocation7], 1
    %1155 = vsyncpa %s1154, 1
  %1156 = vsyncmov [#allocation4]
  %s1157 = vpop.sfrf %1156
  %p1158 = scmp.eq.s32.totalorder %s1157, 0
  %p1159 = pneg %p1158
  %1161 = shalt.err (%p1159)
  %s1162 = scalar_lea.sflag [#allocation4], 1
  %1163 = vsyncmov %s1162
  %s1164 = vpop.sfrf %1163
  %p1165 = scmp.eq.s32.totalorder %s1164, 0
  %p1166 = pneg %p1165
  %1168 = shalt.err (%p1166)

</llo_original>
